<compile_context>
chip_gen: v6e
topology: v6e:2x2x1
jax: 0.10.0
libtpu: 0.0.40
codegen_flags: <defaults>
</compile_context>

<pallas_src>
import jax
import jax.numpy as jnp
from jax.experimental import pallas as pl
from jax.experimental.pallas import tpu as pltpu

INPUT_SIZE = 2
HIDDEN_SIZE = 16
OUTPUT_SIZE = 2


def _rnn_agent_kernel(x_ref, h0_ref, wih_ref, whh_ref, brnn_ref,
                      wfc_ref, bfc_ref, out_ref, hn_ref):
    """Full RNN recurrence + fused FC/softmax epilogue, single invocation.

    x_ref    : (B, T, I)  f32
    h0_ref   : (1, B, H)  f32   (PyTorch num_layers=1 leading dim)
    wih_ref  : (I, H)     f32   (W_ih^T)
    whh_ref  : (H, H)     f32   (W_hh^T)
    brnn_ref : (1, H)     f32   (b_ih + b_hh, pre-summed on host)
    wfc_ref  : (H, O)     f32   (W_fc^T)
    bfc_ref  : (1, O)     f32
    out_ref  : (B, T, O)  f32   softmax probabilities
    hn_ref   : (1, B, H)  f32   final hidden state
    """
    B, T, I = x_ref.shape
    H = whh_ref.shape[0]
    O = wfc_ref.shape[1]

    wih = wih_ref[...]
    whh = whh_ref[...]
    b_rnn = brnn_ref[...]                                     # (1, H)

    # --- hoisted input projection: one batched MXU dot, off the serial chain ---
    # The (B,T,I)->(B*T,I) / ->(B,T,H) collapses are layout-preserving only when
    # T matches the sublane tile; otherwise fall back to per-step projection so no
    # hidden relayout copy lands on the critical path.
    if T % 8 == 0:
        xw = (jnp.dot(x_ref[...].reshape(B * T, I), wih,
                      preferred_element_type=jnp.float32)
              + b_rnn).reshape(B, T, H)                       # (B, T, H)
    else:
        xw = None                                             # project per step below

    # --- serial recurrence: only h @ W_hh^T + tanh stays on the critical path ---
    # T is tiny and static -> fully unrolled; every h_t stays in vregs (no VMEM
    # history scratch), so the scheduler can overlap the per-step tanh (EUP) and
    # the xw slice with the previous step's MXU result pop.
    h = h0_ref[0]                                             # (B, H)
    hs = []
    for t in range(T):
        if xw is not None:
            pre = xw[:, t, :]
        else:
            pre = (jnp.dot(x_ref[:, t, :], wih,
                           preferred_element_type=jnp.float32) + b_rnn)
        h = jnp.tanh(pre + jnp.dot(h, whh, preferred_element_type=jnp.float32))
        hs.append(h)
    hn_ref[0] = h

    # --- epilogue (off the serial chain): one FC matmul + softmax + one slab store ---
    # Assemble the (B*T, H) slab in batch-major row order directly from vregs.
    h_all = jnp.concatenate(
        [hs[t][b:b + 1, :] for b in range(B) for t in range(T)], axis=0)
    logits = (jnp.dot(h_all, wfc_ref[...], preferred_element_type=jnp.float32)
              + bfc_ref[...])                                 # (B*T, O)

    if O == 2:
        # softmax over two logits == logistic of the logit difference; avoids the
        # cross-lane max/sum reductions and any reciprocal refinement.
        d = logits[:, 1:2] - logits[:, 0:1]                   # (B*T, 1)
        p1 = 1.0 / (1.0 + jnp.exp(-d))
        p0 = 1.0 / (1.0 + jnp.exp(d))
        probs = jnp.concatenate([p0, p1], axis=-1)            # (B*T, 2)
    else:
        m = jnp.max(logits, axis=-1, keepdims=True)
        e = jnp.exp(logits - m)
        probs = e / jnp.sum(e, axis=-1, keepdims=True)

    out_ref[...] = probs.reshape(B, T, O)


def prepare_params(params):
    """One-time host-side prep: transposes, casts, bias reshape and b_ih+b_hh pre-sum.

    Keeps the jitted forward free of per-call XLA transpose/cast/reshape ops.
    """
    H = params["w_hh"].shape[0]
    O = params["w_fc"].shape[0]
    return {
        "w_ih_t": jnp.asarray(params["w_ih"], jnp.float32).T,                # (I, H)
        "w_hh_t": jnp.asarray(params["w_hh"], jnp.float32).T,                # (H, H)
        "b_rnn": jnp.asarray(params["b_ih"] + params["b_hh"],
                             jnp.float32).reshape(1, H),                      # (1, H)
        "w_fc_t": jnp.asarray(params["w_fc"], jnp.float32).T,                # (H, O)
        "b_fc": jnp.asarray(params["b_fc"], jnp.float32).reshape(1, O),      # (1, O)
    }


def rnn_agent_forward(x, hidden, prepared):
    """x: (B, T, I) f32, hidden: (1, B, H) f32, prepared: prepare_params(...) output.

    Returns (probs (B, T, O), hidden (1, B, H)).  Inputs are expected in f32 and in
    PyTorch's native layouts; no per-call transposes/casts are performed here.
    """
    B, T, _ = x.shape
    H = prepared["w_hh_t"].shape[0]
    O = prepared["w_fc_t"].shape[1]

    vmem = pl.BlockSpec(memory_space=pltpu.MemorySpace.VMEM)

    probs, h_n = pl.pallas_call(
        _rnn_agent_kernel,
        out_shape=(
            jax.ShapeDtypeStruct((B, T, O), jnp.float32),
            jax.ShapeDtypeStruct((1, B, H), jnp.float32),
        ),
        in_specs=[vmem] * 7,
        out_specs=(vmem, vmem),
    )(x, hidden, prepared["w_ih_t"], prepared["w_hh_t"], prepared["b_rnn"],
      prepared["w_fc_t"], prepared["b_fc"])

    return probs, h_n


def init_params(key, input_size, hidden_size, output_size):
    """Deterministic parameter init (PyTorch-style U(-1/sqrt(H), 1/sqrt(H)))."""
    ks = jax.random.split(key, 6)
    bound = 1.0 / jnp.sqrt(hidden_size)
    u = lambda k, shape: jax.random.uniform(k, shape, jnp.float32, -bound, bound)
    return {
        "w_ih": u(ks[0], (hidden_size, input_size)),
        "w_hh": u(ks[1], (hidden_size, hidden_size)),
        "b_ih": u(ks[2], (hidden_size,)),
        "b_hh": u(ks[3], (hidden_size,)),
        "w_fc": u(ks[4], (output_size, hidden_size)),
        "b_fc": u(ks[5], (output_size,)),
    }


def _reference_forward(x, hidden, params):
    """Pure-JAX reference mirroring torch semantics (for correctness check)."""
    B, T, _ = x.shape
    h = hidden[0]
    outs = []
    for t in range(T):
        h = jnp.tanh(x[:, t, :] @ params["w_ih"].T + params["b_ih"]
                     + h @ params["w_hh"].T + params["b_hh"])
        outs.append(h)
    out = jnp.stack(outs, axis=1)                             # (B, T, H)
    logits = out @ params["w_fc"].T + params["b_fc"]          # (B, T, O)
    return jax.nn.softmax(logits, axis=-1), h[None]


if __name__ == "__main__":
    key = jax.random.PRNGKey(0)
    k_x, k_h, k_p = jax.random.split(key, 3)

    B, T = 2, 8
    x = jax.random.normal(k_x, (B, T, INPUT_SIZE), jnp.float32)
    hidden = jax.random.normal(k_h, (1, B, HIDDEN_SIZE), jnp.float32)
    params = init_params(k_p, INPUT_SIZE, HIDDEN_SIZE, OUTPUT_SIZE)

    prepared = prepare_params(params)            # one-time prep, outside the hot path
    fwd = jax.jit(rnn_agent_forward)

    probs, h_n = fwd(x, hidden, prepared)
    jax.block_until_ready((probs, h_n))

    probs_ref, h_ref = _reference_forward(x, hidden, params)
    assert probs.shape == (B, T, OUTPUT_SIZE) and h_n.shape == (1, B, HIDDEN_SIZE)
    assert jnp.allclose(probs, probs_ref, atol=2e-5, rtol=2e-5)
    assert jnp.allclose(h_n, h_ref, atol=1e-5, rtol=1e-5)

    print("KERNEL_OK")
</pallas_src>

<mosaic_0001>
module attributes {stable_mosaic.version = 11 : i64} {
  func.func @_rnn_agent_kernel(%arg0: memref<2x8x2xf32, #tpu.memory_space<vmem>>, %arg1: memref<1x2x16xf32, #tpu.memory_space<vmem>>, %arg2: memref<2x16xf32, #tpu.memory_space<vmem>>, %arg3: memref<16x16xf32, #tpu.memory_space<vmem>>, %arg4: memref<1x16xf32, #tpu.memory_space<vmem>>, %arg5: memref<16x2xf32, #tpu.memory_space<vmem>>, %arg6: memref<1x2xf32, #tpu.memory_space<vmem>>, %arg7: memref<2x8x2xf32, #tpu.memory_space<vmem>>, %arg8: memref<1x2x16xf32, #tpu.memory_space<vmem>>) attributes {dimension_semantics = [], scalar_prefetch = 0 : i64, scratch_operands = 0 : i64, tpu.core_type = #tpu.core_type<tc>} {
    %c0 = arith.constant 0 : index
    %c0_0 = arith.constant 0 : index
    %0 = vector.load %arg2[%c0, %c0_0] : memref<2x16xf32, #tpu.memory_space<vmem>>, vector<2x16xf32>
    %c0_1 = arith.constant 0 : index
    %c0_2 = arith.constant 0 : index
    %1 = vector.load %arg3[%c0_1, %c0_2] : memref<16x16xf32, #tpu.memory_space<vmem>>, vector<16x16xf32>
    %c0_3 = arith.constant 0 : index
    %c0_4 = arith.constant 0 : index
    %2 = vector.load %arg4[%c0_3, %c0_4] : memref<1x16xf32, #tpu.memory_space<vmem>>, vector<1x16xf32>
    %c0_5 = arith.constant 0 : index
    %c0_6 = arith.constant 0 : index
    %c0_7 = arith.constant 0 : index
    %3 = vector.load %arg0[%c0_5, %c0_6, %c0_7] : memref<2x8x2xf32, #tpu.memory_space<vmem>>, vector<2x8x2xf32>
    %4 = vector.shape_cast %3 : vector<2x8x2xf32> to vector<16x2xf32>
    %cst = arith.constant dense<0.000000e+00> : vector<16x16xf32>
    %5 = tpu.matmul %4, %0, %cst {dimension_numbers = #tpu.dot_dimension_numbers<[1], [0], [0], [1], [0, 0, 1, 1], [], []>} : vector<16x2xf32>, vector<2x16xf32>, vector<16x16xf32> -> vector<16x16xf32>
    %6 = vector.broadcast %2 : vector<1x16xf32> to vector<16x16xf32>
    %7 = arith.addf %5, %6 : vector<16x16xf32>
    %8 = vector.shape_cast %7 : vector<16x16xf32> to vector<2x8x16xf32>
    %c0_8 = arith.constant 0 : index
    %c0_9 = arith.constant 0 : index
    %c0_10 = arith.constant 0 : index
    %9 = vector.load %arg1[%c0_8, %c0_9, %c0_10] : memref<1x2x16xf32, #tpu.memory_space<vmem>>, vector<1x2x16xf32>
    %10 = vector.shape_cast %9 : vector<1x2x16xf32> to vector<2x16xf32>
    %11 = vector.extract_strided_slice %8 {offsets = [0, 0, 0], sizes = [2, 1, 16], strides = [1, 1, 1]} : vector<2x8x16xf32> to vector<2x1x16xf32>
    %12 = vector.shape_cast %11 : vector<2x1x16xf32> to vector<2x16xf32>
    %cst_11 = arith.constant dense<0.000000e+00> : vector<2x16xf32>
    %13 = tpu.matmul %10, %1, %cst_11 {dimension_numbers = #tpu.dot_dimension_numbers<[1], [0], [0], [1], [0, 0, 1, 1], [], []>} : vector<2x16xf32>, vector<16x16xf32>, vector<2x16xf32> -> vector<2x16xf32>
    %14 = arith.addf %12, %13 : vector<2x16xf32>
    %15 = math.tanh %14 : vector<2x16xf32>
    %16 = vector.extract_strided_slice %8 {offsets = [0, 1, 0], sizes = [2, 1, 16], strides = [1, 1, 1]} : vector<2x8x16xf32> to vector<2x1x16xf32>
    %17 = vector.shape_cast %16 : vector<2x1x16xf32> to vector<2x16xf32>
    %cst_12 = arith.constant dense<0.000000e+00> : vector<2x16xf32>
    %18 = tpu.matmul %15, %1, %cst_12 {dimension_numbers = #tpu.dot_dimension_numbers<[1], [0], [0], [1], [0, 0, 1, 1], [], []>} : vector<2x16xf32>, vector<16x16xf32>, vector<2x16xf32> -> vector<2x16xf32>
    %19 = arith.addf %17, %18 : vector<2x16xf32>
    %20 = math.tanh %19 : vector<2x16xf32>
    %21 = vector.extract_strided_slice %8 {offsets = [0, 2, 0], sizes = [2, 1, 16], strides = [1, 1, 1]} : vector<2x8x16xf32> to vector<2x1x16xf32>
    %22 = vector.shape_cast %21 : vector<2x1x16xf32> to vector<2x16xf32>
    %cst_13 = arith.constant dense<0.000000e+00> : vector<2x16xf32>
    %23 = tpu.matmul %20, %1, %cst_13 {dimension_numbers = #tpu.dot_dimension_numbers<[1], [0], [0], [1], [0, 0, 1, 1], [], []>} : vector<2x16xf32>, vector<16x16xf32>, vector<2x16xf32> -> vector<2x16xf32>
    %24 = arith.addf %22, %23 : vector<2x16xf32>
    %25 = math.tanh %24 : vector<2x16xf32>
    %26 = vector.extract_strided_slice %8 {offsets = [0, 3, 0], sizes = [2, 1, 16], strides = [1, 1, 1]} : vector<2x8x16xf32> to vector<2x1x16xf32>
    %27 = vector.shape_cast %26 : vector<2x1x16xf32> to vector<2x16xf32>
    %cst_14 = arith.constant dense<0.000000e+00> : vector<2x16xf32>
    %28 = tpu.matmul %25, %1, %cst_14 {dimension_numbers = #tpu.dot_dimension_numbers<[1], [0], [0], [1], [0, 0, 1, 1], [], []>} : vector<2x16xf32>, vector<16x16xf32>, vector<2x16xf32> -> vector<2x16xf32>
    %29 = arith.addf %27, %28 : vector<2x16xf32>
    %30 = math.tanh %29 : vector<2x16xf32>
    %31 = vector.extract_strided_slice %8 {offsets = [0, 4, 0], sizes = [2, 1, 16], strides = [1, 1, 1]} : vector<2x8x16xf32> to vector<2x1x16xf32>
    %32 = vector.shape_cast %31 : vector<2x1x16xf32> to vector<2x16xf32>
    %cst_15 = arith.constant dense<0.000000e+00> : vector<2x16xf32>
    %33 = tpu.matmul %30, %1, %cst_15 {dimension_numbers = #tpu.dot_dimension_numbers<[1], [0], [0], [1], [0, 0, 1, 1], [], []>} : vector<2x16xf32>, vector<16x16xf32>, vector<2x16xf32> -> vector<2x16xf32>
    %34 = arith.addf %32, %33 : vector<2x16xf32>
    %35 = math.tanh %34 : vector<2x16xf32>
    %36 = vector.extract_strided_slice %8 {offsets = [0, 5, 0], sizes = [2, 1, 16], strides = [1, 1, 1]} : vector<2x8x16xf32> to vector<2x1x16xf32>
    %37 = vector.shape_cast %36 : vector<2x1x16xf32> to vector<2x16xf32>
    %cst_16 = arith.constant dense<0.000000e+00> : vector<2x16xf32>
    %38 = tpu.matmul %35, %1, %cst_16 {dimension_numbers = #tpu.dot_dimension_numbers<[1], [0], [0], [1], [0, 0, 1, 1], [], []>} : vector<2x16xf32>, vector<16x16xf32>, vector<2x16xf32> -> vector<2x16xf32>
    %39 = arith.addf %37, %38 : vector<2x16xf32>
    %40 = math.tanh %39 : vector<2x16xf32>
    %41 = vector.extract_strided_slice %8 {offsets = [0, 6, 0], sizes = [2, 1, 16], strides = [1, 1, 1]} : vector<2x8x16xf32> to vector<2x1x16xf32>
    %42 = vector.shape_cast %41 : vector<2x1x16xf32> to vector<2x16xf32>
    %cst_17 = arith.constant dense<0.000000e+00> : vector<2x16xf32>
    %43 = tpu.matmul %40, %1, %cst_17 {dimension_numbers = #tpu.dot_dimension_numbers<[1], [0], [0], [1], [0, 0, 1, 1], [], []>} : vector<2x16xf32>, vector<16x16xf32>, vector<2x16xf32> -> vector<2x16xf32>
    %44 = arith.addf %42, %43 : vector<2x16xf32>
    %45 = math.tanh %44 : vector<2x16xf32>
    %46 = vector.extract_strided_slice %8 {offsets = [0, 7, 0], sizes = [2, 1, 16], strides = [1, 1, 1]} : vector<2x8x16xf32> to vector<2x1x16xf32>
    %47 = vector.shape_cast %46 : vector<2x1x16xf32> to vector<2x16xf32>
    %cst_18 = arith.constant dense<0.000000e+00> : vector<2x16xf32>
    %48 = tpu.matmul %45, %1, %cst_18 {dimension_numbers = #tpu.dot_dimension_numbers<[1], [0], [0], [1], [0, 0, 1, 1], [], []>} : vector<2x16xf32>, vector<16x16xf32>, vector<2x16xf32> -> vector<2x16xf32>
    %49 = arith.addf %47, %48 : vector<2x16xf32>
    %50 = math.tanh %49 : vector<2x16xf32>
    %c0_19 = arith.constant 0 : index
    %c0_20 = arith.constant 0 : index
    %c0_21 = arith.constant 0 : index
    %51 = vector.load %arg8[%c0_19, %c0_20, %c0_21] : memref<1x2x16xf32, #tpu.memory_space<vmem>>, vector<1x2x16xf32>
    %52 = vector.shape_cast %51 : vector<1x2x16xf32> to vector<2x16xf32>
    %53 = vector.shape_cast %50 : vector<2x16xf32> to vector<1x2x16xf32>
    tpu.vector_store %arg8[%c0_19, %c0_20, %c0_21], %53 {strides = array<i32>} : memref<1x2x16xf32, #tpu.memory_space<vmem>>, vector<1x2x16xf32>,
    %54 = vector.extract_strided_slice %15 {offsets = [0, 0], sizes = [1, 16], strides = [1, 1]} : vector<2x16xf32> to vector<1x16xf32>
    %55 = vector.extract_strided_slice %20 {offsets = [0, 0], sizes = [1, 16], strides = [1, 1]} : vector<2x16xf32> to vector<1x16xf32>
    %56 = vector.extract_strided_slice %25 {offsets = [0, 0], sizes = [1, 16], strides = [1, 1]} : vector<2x16xf32> to vector<1x16xf32>
    %57 = vector.extract_strided_slice %30 {offsets = [0, 0], sizes = [1, 16], strides = [1, 1]} : vector<2x16xf32> to vector<1x16xf32>
    %58 = vector.extract_strided_slice %35 {offsets = [0, 0], sizes = [1, 16], strides = [1, 1]} : vector<2x16xf32> to vector<1x16xf32>
    %59 = vector.extract_strided_slice %40 {offsets = [0, 0], sizes = [1, 16], strides = [1, 1]} : vector<2x16xf32> to vector<1x16xf32>
    %60 = vector.extract_strided_slice %45 {offsets = [0, 0], sizes = [1, 16], strides = [1, 1]} : vector<2x16xf32> to vector<1x16xf32>
    %61 = vector.extract_strided_slice %50 {offsets = [0, 0], sizes = [1, 16], strides = [1, 1]} : vector<2x16xf32> to vector<1x16xf32>
    %62 = vector.extract_strided_slice %15 {offsets = [1, 0], sizes = [1, 16], strides = [1, 1]} : vector<2x16xf32> to vector<1x16xf32>
    %63 = vector.extract_strided_slice %20 {offsets = [1, 0], sizes = [1, 16], strides = [1, 1]} : vector<2x16xf32> to vector<1x16xf32>
    %64 = vector.extract_strided_slice %25 {offsets = [1, 0], sizes = [1, 16], strides = [1, 1]} : vector<2x16xf32> to vector<1x16xf32>
    %65 = vector.extract_strided_slice %30 {offsets = [1, 0], sizes = [1, 16], strides = [1, 1]} : vector<2x16xf32> to vector<1x16xf32>
    %66 = vector.extract_strided_slice %35 {offsets = [1, 0], sizes = [1, 16], strides = [1, 1]} : vector<2x16xf32> to vector<1x16xf32>
    %67 = vector.extract_strided_slice %40 {offsets = [1, 0], sizes = [1, 16], strides = [1, 1]} : vector<2x16xf32> to vector<1x16xf32>
    %68 = vector.extract_strided_slice %45 {offsets = [1, 0], sizes = [1, 16], strides = [1, 1]} : vector<2x16xf32> to vector<1x16xf32>
    %69 = vector.extract_strided_slice %50 {offsets = [1, 0], sizes = [1, 16], strides = [1, 1]} : vector<2x16xf32> to vector<1x16xf32>
    %70 = tpu.concatenate %54, %55, %56, %57, %58, %59, %60, %61, %62, %63, %64, %65, %66, %67, %68, %69 in 0 : vector<1x16xf32>, vector<1x16xf32>, vector<1x16xf32>, vector<1x16xf32>, vector<1x16xf32>, vector<1x16xf32>, vector<1x16xf32>, vector<1x16xf32>, vector<1x16xf32>, vector<1x16xf32>, vector<1x16xf32>, vector<1x16xf32>, vector<1x16xf32>, vector<1x16xf32>, vector<1x16xf32>, vector<1x16xf32> -> vector<16x16xf32>
    %c0_22 = arith.constant 0 : index
    %c0_23 = arith.constant 0 : index
    %71 = vector.load %arg5[%c0_22, %c0_23] : memref<16x2xf32, #tpu.memory_space<vmem>>, vector<16x2xf32>
    %cst_24 = arith.constant dense<0.000000e+00> : vector<16x2xf32>
    %72 = tpu.matmul %70, %71, %cst_24 {dimension_numbers = #tpu.dot_dimension_numbers<[1], [0], [0], [1], [0, 0, 1, 1], [], []>} : vector<16x16xf32>, vector<16x2xf32>, vector<16x2xf32> -> vector<16x2xf32>
    %c0_25 = arith.constant 0 : index
    %c0_26 = arith.constant 0 : index
    %73 = vector.load %arg6[%c0_25, %c0_26] : memref<1x2xf32, #tpu.memory_space<vmem>>, vector<1x2xf32>
    %74 = vector.broadcast %73 : vector<1x2xf32> to vector<16x2xf32>
    %75 = arith.addf %72, %74 : vector<16x2xf32>
    %76 = vector.extract_strided_slice %75 {offsets = [0, 1], sizes = [16, 1], strides = [1, 1]} : vector<16x2xf32> to vector<16x1xf32>
    %77 = vector.extract_strided_slice %75 {offsets = [0, 0], sizes = [16, 1], strides = [1, 1]} : vector<16x2xf32> to vector<16x1xf32>
    %78 = arith.subf %76, %77 : vector<16x1xf32>
    %cst_27 = arith.constant 0.000000e+00 : f32
    %79 = vector.broadcast %cst_27 : f32 to vector<16x1xf32>
    %80 = arith.subf %79, %78 : vector<16x1xf32>
    %81 = math.exp %80 : vector<16x1xf32>
    %cst_28 = arith.constant 1.000000e+00 : f32
    %82 = vector.broadcast %cst_28 : f32 to vector<16x1xf32>
    %83 = arith.addf %82, %81 : vector<16x1xf32>
    %cst_29 = arith.constant 1.000000e+00 : f32
    %84 = vector.broadcast %cst_29 : f32 to vector<16x1xf32>
    %85 = arith.divf %84, %83 : vector<16x1xf32>
    %86 = math.exp %78 : vector<16x1xf32>
    %cst_30 = arith.constant 1.000000e+00 : f32
    %87 = vector.broadcast %cst_30 : f32 to vector<16x1xf32>
    %88 = arith.addf %87, %86 : vector<16x1xf32>
    %cst_31 = arith.constant 1.000000e+00 : f32
    %89 = vector.broadcast %cst_31 : f32 to vector<16x1xf32>
    %90 = arith.divf %89, %88 : vector<16x1xf32>
    %91 = tpu.concatenate %90, %85 in 1 : vector<16x1xf32>, vector<16x1xf32> -> vector<16x2xf32>
    %92 = vector.shape_cast %91 : vector<16x2xf32> to vector<2x8x2xf32>
    %c0_32 = arith.constant 0 : index
    %c0_33 = arith.constant 0 : index
    %c0_34 = arith.constant 0 : index
    %93 = vector.load %arg7[%c0_32, %c0_33, %c0_34] : memref<2x8x2xf32, #tpu.memory_space<vmem>>, vector<2x8x2xf32>
    tpu.vector_store %arg7[%c0_32, %c0_33, %c0_34], %92 {strides = array<i32>} : memref<2x8x2xf32, #tpu.memory_space<vmem>>, vector<2x8x2xf32>,
    return
  }
}

</mosaic_0001>

<llo_original>
// kernel: rnn_agent_forward.1
$region0: #{rnn_agent_forward.1}
  #allocation0 [shape = 'u32[]', space=smem, size = 0x4, offset = 0x4, fixed_abs, tag = 'smem constant byte address 0x4 - core index']
  #allocation1 [shape = 'u32[144,128]{1,0:T(1,128)}', space=vmem, size = 0x12000, scoped, tag = 'internal scratch']
  %s0 = inlined_call_operand.vmem [shape: f32[2,8,2], index: 0, kind: input, shape index: {}]
  %s1 = inlined_call_operand.vmem [shape: f32[1,2,16], index: 1, kind: input, shape index: {}]
  %s2 = inlined_call_operand.vmem [shape: f32[2,16], index: 2, kind: input, shape index: {}]
  %s3 = inlined_call_operand.vmem [shape: f32[16,16], index: 3, kind: input, shape index: {}]
  %s4 = inlined_call_operand.vmem [shape: f32[1,16], index: 4, kind: input, shape index: {}]
  %s5 = inlined_call_operand.vmem [shape: f32[16,2], index: 5, kind: input, shape index: {}]
  %s6 = inlined_call_operand.vmem [shape: f32[1,2], index: 6, kind: input, shape index: {}]
  %s7 = inlined_call_operand.vmem [shape: f32[2,8,2], index: 7, kind: output, shape index: {0}]
  %s8 = inlined_call_operand.hbm [shape: f32[1,2,16], index: 8, kind: output, shape index: {1}]
  %9 = xla_tuple %s7, %s8
  %s10 = sld [smem:[#allocation0]]
  $region46: #{rnn_agent_forward.1} parent=0
    _
  %s12 = ssub.s32 1, %s10
  %s13 = scalar_select 0, %s12, %s10
  $region1: #{rnn_agent_forward.1} parent=0
    #allocation2 [shape = 'u8[1024]{0}', space=vmem, size = 0x400, scoped, tag = 'output window, operand 1, single buffered']
    #allocation3 [shape = 's32[1]{0}', space=sflag, size = 0x4, scoped, tag = 'scoped memory for rnn_agent_forward.1']
    %14 = vsyncpa [#allocation3], 0
    // Predicated region
    $region2: #{rnn_agent_forward.1} parent=1 // pred_check
      _
    $region3: #{rnn_agent_forward.1} parent=1 // pred_check_branch
      %16 = sbr.rel (0) target = $region5
    $region4: #{rnn_agent_forward.1} parent=1 // pred_region
      _
    $region5: #{rnn_agent_forward.1} parent=1 // pred_fallthru
      _
    // Predicated region
    $region6: #{rnn_agent_forward.1} parent=1 // pred_check
      _
    $region7: #{rnn_agent_forward.1} parent=1 // pred_check_branch
      %18 = sbr.rel (0) target = $region9
    $region8: #{rnn_agent_forward.1} parent=1 // pred_region
      _
    $region9: #{rnn_agent_forward.1} parent=1 // pred_fallthru
      _
    // Predicated region
    $region10: #{rnn_agent_forward.1} parent=1 // pred_check
      _
    $region11: #{rnn_agent_forward.1} parent=1 // pred_check_branch
      %20 = sbr.rel (0) target = $region13
    $region12: #{rnn_agent_forward.1} parent=1 // pred_region
      _
    $region13: #{rnn_agent_forward.1} parent=1 // pred_fallthru
      _
    // Predicated region
    $region14: #{rnn_agent_forward.1} parent=1 // pred_check
      _
    $region15: #{rnn_agent_forward.1} parent=1 // pred_check_branch
      %22 = sbr.rel (0) target = $region17
    $region16: #{rnn_agent_forward.1} parent=1 // pred_region
      _
    $region17: #{rnn_agent_forward.1} parent=1 // pred_fallthru
      _
    // Predicated region
    $region18: #{rnn_agent_forward.1} parent=1 // pred_check
      _
    $region19: #{rnn_agent_forward.1} parent=1 // pred_check_branch
      %24 = sbr.rel (0) target = $region21
    $region20: #{rnn_agent_forward.1} parent=1 // pred_region
      _
    $region21: #{rnn_agent_forward.1} parent=1 // pred_fallthru
      _
    // Predicated region
    $region22: #{rnn_agent_forward.1} parent=1 // pred_check
      _
    $region23: #{rnn_agent_forward.1} parent=1 // pred_check_branch
      %26 = sbr.rel (0) target = $region25
    $region24: #{rnn_agent_forward.1} parent=1 // pred_region
      _
    $region25: #{rnn_agent_forward.1} parent=1 // pred_fallthru
      _
    // Predicated region
    $region26: #{rnn_agent_forward.1} parent=1 // pred_check
      _
    $region27: #{rnn_agent_forward.1} parent=1 // pred_check_branch
      %28 = sbr.rel (0) target = $region29
    $region28: #{rnn_agent_forward.1} parent=1 // pred_region
      _
    $region29: #{rnn_agent_forward.1} parent=1 // pred_fallthru
      _
    %v29 = vld [vmem:[%s2] sm:$0x3]
    %v30 = vld [vmem:[%s3] sm:$0xff]
    %v31 = vld [vmem:[%s3 + $0x8] sm:$0xff]
    %v32 = vld [vmem:[%s4] sm:$0x1]
    %v33 = vld [vmem:[%s0] sm:$0xff]
    %v34 = vld [vmem:[%s0 + $0x8] sm:$0xff]
    %v36 = vlaneseq
    %v37 = vshrl.u32 %v36, 7
    %v38 = vsub.s32 0, %v37
    %v39 = vrot.slane %v32, %v38
    %vm41 = vcmask 15360
    %v43 = vsel %vm41, %v33, 0
    %v46 = vsel %vm41, %v34, 0
    %vm48 = vcmask 1041408
    %v50 = vsel %vm48, %v29, 0
    %52 = vmatprep.subr.mxu0 0.0
    %53 = vmatpush1.msra.mxu0 0.0
    %54 = vmatprep.subr.mxu0 0.0
    %55 = vmatpush1.msra.mxu0 0.0
    %56 = vmatprep.subr.mxu0 0.0
    %57 = vmatpush1.msra.mxu0 0.0
    %58 = vmatprep.subr.mxu0 0.0
    %59 = vmatpush1.msra.mxu0 0.0
    %60 = vmatprep.subr.mxu0 0.0
    %61 = vmatpush1.msra.mxu0 0.0
    %62 = vmatprep.subr.mxu0 0.0
    %63 = vmatpush1.msra.mxu0 0.0
    %64 = vmatprep.subr.mxu0 0.0
    %65 = vmatpush1.msra.mxu0 0.0
    %66 = vmatprep.subr.mxu0 0.0
    %67 = vmatpush1.msra.mxu0 0.0
    %68 = vmatprep.subr.mxu0 0.0
    %69 = vmatpush1.msra.mxu0 0.0
    %70 = vmatprep.subr.mxu0 0.0
    %71 = vmatpush1.msra.mxu0 0.0
    %72 = vmatprep.subr.mxu0 0.0
    %73 = vmatpush1.msra.mxu0 0.0
    %74 = vmatprep.subr.mxu0 0.0
    %75 = vmatpush1.msra.mxu0 0.0
    %76 = vmatprep.subr.mxu0 0.0
    %77 = vmatpush1.msra.mxu0 0.0
    %78 = vmatprep.subr.mxu0 0.0
    %79 = vmatpush1.msra.mxu0 0.0
    %80 = vmatprep.subr.mxu0 0.0
    %81 = vmatpush1.msra.mxu0 0.0
    %82 = vmatprep.subr.mxu0 0.0
    %83 = vmatpush1.msra.mxu0 %v50
    %84 = vmatprep.subr.mxu0 0.0
    %85 = vmatpush2.msra.mxu0 0.0
    %86 = vmatprep.subr.mxu0 0.0
    %87 = vmatpush2.msra.mxu0 0.0
    %88 = vmatprep.subr.mxu0 0.0
    %89 = vmatpush2.msra.mxu0 0.0
    %90 = vmatprep.subr.mxu0 0.0
    %91 = vmatpush2.msra.mxu0 0.0
    %92 = vmatprep.subr.mxu0 0.0
    %93 = vmatpush2.msra.mxu0 0.0
    %94 = vmatprep.subr.mxu0 0.0
    %95 = vmatpush2.msra.mxu0 0.0
    %96 = vmatprep.subr.mxu0 0.0
    %97 = vmatpush2.msra.mxu0 0.0
    %98 = vmatprep.subr.mxu0 0.0
    %99 = vmatpush2.msra.mxu0 0.0
    %100 = vmatprep.subr.mxu0 0.0
    %101 = vmatpush2.msra.mxu0 0.0
    %102 = vmatprep.subr.mxu0 0.0
    %103 = vmatpush2.msra.mxu0 0.0
    %104 = vmatprep.subr.mxu0 0.0
    %105 = vmatpush2.msra.mxu0 0.0
    %106 = vmatprep.subr.mxu0 0.0
    %107 = vmatpush2.msra.mxu0 0.0
    %108 = vmatprep.subr.mxu0 0.0
    %109 = vmatpush2.msra.mxu0 0.0
    %110 = vmatprep.subr.mxu0 0.0
    %111 = vmatpush2.msra.mxu0 0.0
    %112 = vmatprep.subr.mxu0 0.0
    %113 = vmatpush2.msra.mxu0 0.0
    %114 = vmatprep.subr.mxu0 0.0
    %115 = vmatpush2.msra.mxu0 0.0
    %116 = vmatprep.mubr.f32.mxu0 0.0
    %117 = vmatmul.mubr.f32.gmra.mxu0 %v43
    %v118 = vpop.f32.mrf.mxu0
    %v119 = vadd.f32 %v39, %v118
    %v120 = vpop.f32.mrf.mxu0
    %121 = vmatprep.mubr.f32.mxu0 0.0
    %122 = vmatmul.mubr.f32.gmra.mxu0 %v46
    %v123 = vpop.f32.mrf.mxu0
    %v124 = vadd.f32 %v39, %v123
    %v125 = vpop.f32.mrf.mxu0
    %126 = vdwg.mxu0
    %v127 = vld [vmem:[%s1] sm:$0x3]
    %vm128 = vcmask 130048
    %v130 = vsel %vm128, %v127, 0
    %132 = vmatprep.subr.mxu0 0.0
    %133 = vmatpush1.msra.mxu0 0.0
    %134 = vmatprep.subr.mxu0 0.0
    %135 = vmatpush1.msra.mxu0 0.0
    %136 = vmatprep.subr.mxu0 0.0
    %137 = vmatpush1.msra.mxu0 0.0
    %138 = vmatprep.subr.mxu0 0.0
    %139 = vmatpush1.msra.mxu0 0.0
    %140 = vmatprep.subr.mxu0 0.0
    %141 = vmatpush1.msra.mxu0 0.0
    %142 = vmatprep.subr.mxu0 0.0
    %143 = vmatpush1.msra.mxu0 0.0
    %144 = vmatprep.subr.mxu0 0.0
    %145 = vmatpush1.msra.mxu0 0.0
    %146 = vmatprep.subr.mxu0 0.0
    %147 = vmatpush1.msra.mxu0 0.0
    %148 = vmatprep.subr.mxu0 0.0
    %149 = vmatpush1.msra.mxu0 0.0
    %150 = vmatprep.subr.mxu0 0.0
    %151 = vmatpush1.msra.mxu0 0.0
    %152 = vmatprep.subr.mxu0 0.0
    %153 = vmatpush1.msra.mxu0 0.0
    %154 = vmatprep.subr.mxu0 0.0
    %155 = vmatpush1.msra.mxu0 0.0
    %156 = vmatprep.subr.mxu0 0.0
    %157 = vmatpush1.msra.mxu0 0.0
    %158 = vmatprep.subr.mxu0 0.0
    %159 = vmatpush1.msra.mxu0 0.0
    %160 = vmatprep.subr.mxu0 0.0
    %161 = vmatpush1.msra.mxu0 %v31
    %162 = vmatprep.subr.mxu0 0.0
    %163 = vmatpush1.msra.mxu0 %v30
    %164 = vmatprep.subr.mxu0 0.0
    %165 = vmatpush2.msra.mxu0 0.0
    %166 = vmatprep.subr.mxu0 0.0
    %167 = vmatpush2.msra.mxu0 0.0
    %168 = vmatprep.subr.mxu0 0.0
    %169 = vmatpush2.msra.mxu0 0.0
    %170 = vmatprep.subr.mxu0 0.0
    %171 = vmatpush2.msra.mxu0 0.0
    %172 = vmatprep.subr.mxu0 0.0
    %173 = vmatpush2.msra.mxu0 0.0
    %174 = vmatprep.subr.mxu0 0.0
    %175 = vmatpush2.msra.mxu0 0.0
    %176 = vmatprep.subr.mxu0 0.0
    %177 = vmatpush2.msra.mxu0 0.0
    %178 = vmatprep.subr.mxu0 0.0
    %179 = vmatpush2.msra.mxu0 0.0
    %180 = vmatprep.subr.mxu0 0.0
    %181 = vmatpush2.msra.mxu0 0.0
    %182 = vmatprep.subr.mxu0 0.0
    %183 = vmatpush2.msra.mxu0 0.0
    %184 = vmatprep.subr.mxu0 0.0
    %185 = vmatpush2.msra.mxu0 0.0
    %186 = vmatprep.subr.mxu0 0.0
    %187 = vmatpush2.msra.mxu0 0.0
    %188 = vmatprep.subr.mxu0 0.0
    %189 = vmatpush2.msra.mxu0 0.0
    %190 = vmatprep.subr.mxu0 0.0
    %191 = vmatpush2.msra.mxu0 0.0
    %192 = vmatprep.subr.mxu0 0.0
    %193 = vmatpush2.msra.mxu0 0.0
    %194 = vmatprep.subr.mxu0 0.0
    %195 = vmatpush2.msra.mxu0 0.0
    %196 = vmatprep.mubr.f32.mxu0 0.0
    %197 = vmatmul.mubr.f32.gmra.mxu0 %v130
    %v198 = vpop.f32.mrf.mxu0
    %v199 = vadd.f32 0.0, %v198
    %v200 = vpop.f32.mrf.mxu0
    %201 = vdwg.mxu0
    %v203 = vrot.slane %v199, 1
    %v206 = vadd.f32 %v119, %v199
    %v207 = vadd.f32 %v124, %v203
    %v208 = vtanh.pop %v206
    %v209 = vtanh.pop %v207
    %v212 = vrot.slane %v209, 7
    %vm213 = vcmask 1041409
    %v214 = vsel %vm213, %v212, %v208
    %v215 = vsel %vm128, %v214, 0
    %217 = vmatprep.subr.mxu0 0.0
    %218 = vmatpush1.msra.mxu0 0.0
    %219 = vmatprep.subr.mxu0 0.0
    %220 = vmatpush1.msra.mxu0 0.0
    %221 = vmatprep.subr.mxu0 0.0
    %222 = vmatpush1.msra.mxu0 0.0
    %223 = vmatprep.subr.mxu0 0.0
    %224 = vmatpush1.msra.mxu0 0.0
    %225 = vmatprep.subr.mxu0 0.0
    %226 = vmatpush1.msra.mxu0 0.0
    %227 = vmatprep.subr.mxu0 0.0
    %228 = vmatpush1.msra.mxu0 0.0
    %229 = vmatprep.subr.mxu0 0.0
    %230 = vmatpush1.msra.mxu0 0.0
    %231 = vmatprep.subr.mxu0 0.0
    %232 = vmatpush1.msra.mxu0 0.0
    %233 = vmatprep.subr.mxu0 0.0
    %234 = vmatpush1.msra.mxu0 0.0
    %235 = vmatprep.subr.mxu0 0.0
    %236 = vmatpush1.msra.mxu0 0.0
    %237 = vmatprep.subr.mxu0 0.0
    %238 = vmatpush1.msra.mxu0 0.0
    %239 = vmatprep.subr.mxu0 0.0
    %240 = vmatpush1.msra.mxu0 0.0
    %241 = vmatprep.subr.mxu0 0.0
    %242 = vmatpush1.msra.mxu0 0.0
    %243 = vmatprep.subr.mxu0 0.0
    %244 = vmatpush1.msra.mxu0 0.0
    %245 = vmatprep.subr.mxu0 0.0
    %246 = vmatpush1.msra.mxu0 %v31
    %247 = vmatprep.subr.mxu0 0.0
    %248 = vmatpush1.msra.mxu0 %v30
    %249 = vmatprep.subr.mxu0 0.0
    %250 = vmatpush2.msra.mxu0 0.0
    %251 = vmatprep.subr.mxu0 0.0
    %252 = vmatpush2.msra.mxu0 0.0
    %253 = vmatprep.subr.mxu0 0.0
    %254 = vmatpush2.msra.mxu0 0.0
    %255 = vmatprep.subr.mxu0 0.0
    %256 = vmatpush2.msra.mxu0 0.0
    %257 = vmatprep.subr.mxu0 0.0
    %258 = vmatpush2.msra.mxu0 0.0
    %259 = vmatprep.subr.mxu0 0.0
    %260 = vmatpush2.msra.mxu0 0.0
    %261 = vmatprep.subr.mxu0 0.0
    %262 = vmatpush2.msra.mxu0 0.0
    %263 = vmatprep.subr.mxu0 0.0
    %264 = vmatpush2.msra.mxu0 0.0
    %265 = vmatprep.subr.mxu0 0.0
    %266 = vmatpush2.msra.mxu0 0.0
    %267 = vmatprep.subr.mxu0 0.0
    %268 = vmatpush2.msra.mxu0 0.0
    %269 = vmatprep.subr.mxu0 0.0
    %270 = vmatpush2.msra.mxu0 0.0
    %271 = vmatprep.subr.mxu0 0.0
    %272 = vmatpush2.msra.mxu0 0.0
    %273 = vmatprep.subr.mxu0 0.0
    %274 = vmatpush2.msra.mxu0 0.0
    %275 = vmatprep.subr.mxu0 0.0
    %276 = vmatpush2.msra.mxu0 0.0
    %277 = vmatprep.subr.mxu0 0.0
    %278 = vmatpush2.msra.mxu0 0.0
    %279 = vmatprep.subr.mxu0 0.0
    %280 = vmatpush2.msra.mxu0 0.0
    %281 = vmatprep.mubr.f32.mxu0 0.0
    %282 = vmatmul.mubr.f32.gmra.mxu0 %v215
    %v283 = vpop.f32.mrf.mxu0
    %v284 = vadd.f32 0.0, %v283
    %v285 = vpop.f32.mrf.mxu0
    %286 = vdwg.mxu0
    %v288 = vrot.slane %v284, 7
    %v291 = vadd.f32 %v119, %v288
    %v292 = vadd.f32 %v124, %v284
    %v293 = vtanh.pop %v291
    %v294 = vtanh.pop %v292
    %v297 = vrot.slane %v293, 1
    %v298 = vsel %vm213, %v294, %v297
    %v299 = vsel %vm128, %v298, 0
    %301 = vmatprep.subr.mxu0 0.0
    %302 = vmatpush1.msra.mxu0 0.0
    %303 = vmatprep.subr.mxu0 0.0
    %304 = vmatpush1.msra.mxu0 0.0
    %305 = vmatprep.subr.mxu0 0.0
    %306 = vmatpush1.msra.mxu0 0.0
    %307 = vmatprep.subr.mxu0 0.0
    %308 = vmatpush1.msra.mxu0 0.0
    %309 = vmatprep.subr.mxu0 0.0
    %310 = vmatpush1.msra.mxu0 0.0
    %311 = vmatprep.subr.mxu0 0.0
    %312 = vmatpush1.msra.mxu0 0.0
    %313 = vmatprep.subr.mxu0 0.0
    %314 = vmatpush1.msra.mxu0 0.0
    %315 = vmatprep.subr.mxu0 0.0
    %316 = vmatpush1.msra.mxu0 0.0
    %317 = vmatprep.subr.mxu0 0.0
    %318 = vmatpush1.msra.mxu0 0.0
    %319 = vmatprep.subr.mxu0 0.0
    %320 = vmatpush1.msra.mxu0 0.0
    %321 = vmatprep.subr.mxu0 0.0
    %322 = vmatpush1.msra.mxu0 0.0
    %323 = vmatprep.subr.mxu0 0.0
    %324 = vmatpush1.msra.mxu0 0.0
    %325 = vmatprep.subr.mxu0 0.0
    %326 = vmatpush1.msra.mxu0 0.0
    %327 = vmatprep.subr.mxu0 0.0
    %328 = vmatpush1.msra.mxu0 0.0
    %329 = vmatprep.subr.mxu0 0.0
    %330 = vmatpush1.msra.mxu0 %v31
    %331 = vmatprep.subr.mxu0 0.0
    %332 = vmatpush1.msra.mxu0 %v30
    %333 = vmatprep.subr.mxu0 0.0
    %334 = vmatpush2.msra.mxu0 0.0
    %335 = vmatprep.subr.mxu0 0.0
    %336 = vmatpush2.msra.mxu0 0.0
    %337 = vmatprep.subr.mxu0 0.0
    %338 = vmatpush2.msra.mxu0 0.0
    %339 = vmatprep.subr.mxu0 0.0
    %340 = vmatpush2.msra.mxu0 0.0
    %341 = vmatprep.subr.mxu0 0.0
    %342 = vmatpush2.msra.mxu0 0.0
    %343 = vmatprep.subr.mxu0 0.0
    %344 = vmatpush2.msra.mxu0 0.0
    %345 = vmatprep.subr.mxu0 0.0
    %346 = vmatpush2.msra.mxu0 0.0
    %347 = vmatprep.subr.mxu0 0.0
    %348 = vmatpush2.msra.mxu0 0.0
    %349 = vmatprep.subr.mxu0 0.0
    %350 = vmatpush2.msra.mxu0 0.0
    %351 = vmatprep.subr.mxu0 0.0
    %352 = vmatpush2.msra.mxu0 0.0
    %353 = vmatprep.subr.mxu0 0.0
    %354 = vmatpush2.msra.mxu0 0.0
    %355 = vmatprep.subr.mxu0 0.0
    %356 = vmatpush2.msra.mxu0 0.0
    %357 = vmatprep.subr.mxu0 0.0
    %358 = vmatpush2.msra.mxu0 0.0
    %359 = vmatprep.subr.mxu0 0.0
    %360 = vmatpush2.msra.mxu0 0.0
    %361 = vmatprep.subr.mxu0 0.0
    %362 = vmatpush2.msra.mxu0 0.0
    %363 = vmatprep.subr.mxu0 0.0
    %364 = vmatpush2.msra.mxu0 0.0
    %365 = vmatprep.mubr.f32.mxu0 0.0
    %366 = vmatmul.mubr.f32.gmra.mxu0 %v299
    %v367 = vpop.f32.mrf.mxu0
    %v368 = vadd.f32 0.0, %v367
    %v369 = vpop.f32.mrf.mxu0
    %370 = vdwg.mxu0
    %v372 = vrot.slane %v368, 6
    %v373 = vrot.slane %v368, 7
    %v376 = vadd.f32 %v119, %v372
    %v377 = vadd.f32 %v124, %v373
    %v378 = vtanh.pop %v376
    %v379 = vtanh.pop %v377
    %v382 = vrot.slane %v378, 2
    %v383 = vrot.slane %v379, 1
    %v384 = vsel %vm213, %v383, %v382
    %v385 = vsel %vm128, %v384, 0
    %387 = vmatprep.subr.mxu0 0.0
    %388 = vmatpush1.msra.mxu0 0.0
    %389 = vmatprep.subr.mxu0 0.0
    %390 = vmatpush1.msra.mxu0 0.0
    %391 = vmatprep.subr.mxu0 0.0
    %392 = vmatpush1.msra.mxu0 0.0
    %393 = vmatprep.subr.mxu0 0.0
    %394 = vmatpush1.msra.mxu0 0.0
    %395 = vmatprep.subr.mxu0 0.0
    %396 = vmatpush1.msra.mxu0 0.0
    %397 = vmatprep.subr.mxu0 0.0
    %398 = vmatpush1.msra.mxu0 0.0
    %399 = vmatprep.subr.mxu0 0.0
    %400 = vmatpush1.msra.mxu0 0.0
    %401 = vmatprep.subr.mxu0 0.0
    %402 = vmatpush1.msra.mxu0 0.0
    %403 = vmatprep.subr.mxu0 0.0
    %404 = vmatpush1.msra.mxu0 0.0
    %405 = vmatprep.subr.mxu0 0.0
    %406 = vmatpush1.msra.mxu0 0.0
    %407 = vmatprep.subr.mxu0 0.0
    %408 = vmatpush1.msra.mxu0 0.0
    %409 = vmatprep.subr.mxu0 0.0
    %410 = vmatpush1.msra.mxu0 0.0
    %411 = vmatprep.subr.mxu0 0.0
    %412 = vmatpush1.msra.mxu0 0.0
    %413 = vmatprep.subr.mxu0 0.0
    %414 = vmatpush1.msra.mxu0 0.0
    %415 = vmatprep.subr.mxu0 0.0
    %416 = vmatpush1.msra.mxu0 %v31
    %417 = vmatprep.subr.mxu0 0.0
    %418 = vmatpush1.msra.mxu0 %v30
    %419 = vmatprep.subr.mxu0 0.0
    %420 = vmatpush2.msra.mxu0 0.0
    %421 = vmatprep.subr.mxu0 0.0
    %422 = vmatpush2.msra.mxu0 0.0
    %423 = vmatprep.subr.mxu0 0.0
    %424 = vmatpush2.msra.mxu0 0.0
    %425 = vmatprep.subr.mxu0 0.0
    %426 = vmatpush2.msra.mxu0 0.0
    %427 = vmatprep.subr.mxu0 0.0
    %428 = vmatpush2.msra.mxu0 0.0
    %429 = vmatprep.subr.mxu0 0.0
    %430 = vmatpush2.msra.mxu0 0.0
    %431 = vmatprep.subr.mxu0 0.0
    %432 = vmatpush2.msra.mxu0 0.0
    %433 = vmatprep.subr.mxu0 0.0
    %434 = vmatpush2.msra.mxu0 0.0
    %435 = vmatprep.subr.mxu0 0.0
    %436 = vmatpush2.msra.mxu0 0.0
    %437 = vmatprep.subr.mxu0 0.0
    %438 = vmatpush2.msra.mxu0 0.0
    %439 = vmatprep.subr.mxu0 0.0
    %440 = vmatpush2.msra.mxu0 0.0
    %441 = vmatprep.subr.mxu0 0.0
    %442 = vmatpush2.msra.mxu0 0.0
    %443 = vmatprep.subr.mxu0 0.0
    %444 = vmatpush2.msra.mxu0 0.0
    %445 = vmatprep.subr.mxu0 0.0
    %446 = vmatpush2.msra.mxu0 0.0
    %447 = vmatprep.subr.mxu0 0.0
    %448 = vmatpush2.msra.mxu0 0.0
    %449 = vmatprep.subr.mxu0 0.0
    %450 = vmatpush2.msra.mxu0 0.0
    %451 = vmatprep.mubr.f32.mxu0 0.0
    %452 = vmatmul.mubr.f32.gmra.mxu0 %v385
    %v453 = vpop.f32.mrf.mxu0
    %v454 = vadd.f32 0.0, %v453
    %v455 = vpop.f32.mrf.mxu0
    %456 = vdwg.mxu0
    %v458 = vrot.slane %v454, 5
    %v459 = vrot.slane %v454, 6
    %v462 = vadd.f32 %v119, %v458
    %v463 = vadd.f32 %v124, %v459
    %v464 = vtanh.pop %v462
    %v465 = vtanh.pop %v463
    %v468 = vrot.slane %v464, 3
    %v469 = vrot.slane %v465, 2
    %v470 = vsel %vm213, %v469, %v468
    %v471 = vsel %vm128, %v470, 0
    %473 = vmatprep.subr.mxu0 0.0
    %474 = vmatpush1.msra.mxu0 0.0
    %475 = vmatprep.subr.mxu0 0.0
    %476 = vmatpush1.msra.mxu0 0.0
    %477 = vmatprep.subr.mxu0 0.0
    %478 = vmatpush1.msra.mxu0 0.0
    %479 = vmatprep.subr.mxu0 0.0
    %480 = vmatpush1.msra.mxu0 0.0
    %481 = vmatprep.subr.mxu0 0.0
    %482 = vmatpush1.msra.mxu0 0.0
    %483 = vmatprep.subr.mxu0 0.0
    %484 = vmatpush1.msra.mxu0 0.0
    %485 = vmatprep.subr.mxu0 0.0
    %486 = vmatpush1.msra.mxu0 0.0
    %487 = vmatprep.subr.mxu0 0.0
    %488 = vmatpush1.msra.mxu0 0.0
    %489 = vmatprep.subr.mxu0 0.0
    %490 = vmatpush1.msra.mxu0 0.0
    %491 = vmatprep.subr.mxu0 0.0
    %492 = vmatpush1.msra.mxu0 0.0
    %493 = vmatprep.subr.mxu0 0.0
    %494 = vmatpush1.msra.mxu0 0.0
    %495 = vmatprep.subr.mxu0 0.0
    %496 = vmatpush1.msra.mxu0 0.0
    %497 = vmatprep.subr.mxu0 0.0
    %498 = vmatpush1.msra.mxu0 0.0
    %499 = vmatprep.subr.mxu0 0.0
    %500 = vmatpush1.msra.mxu0 0.0
    %501 = vmatprep.subr.mxu0 0.0
    %502 = vmatpush1.msra.mxu0 %v31
    %503 = vmatprep.subr.mxu0 0.0
    %504 = vmatpush1.msra.mxu0 %v30
    %505 = vmatprep.subr.mxu0 0.0
    %506 = vmatpush2.msra.mxu0 0.0
    %507 = vmatprep.subr.mxu0 0.0
    %508 = vmatpush2.msra.mxu0 0.0
    %509 = vmatprep.subr.mxu0 0.0
    %510 = vmatpush2.msra.mxu0 0.0
    %511 = vmatprep.subr.mxu0 0.0
    %512 = vmatpush2.msra.mxu0 0.0
    %513 = vmatprep.subr.mxu0 0.0
    %514 = vmatpush2.msra.mxu0 0.0
    %515 = vmatprep.subr.mxu0 0.0
    %516 = vmatpush2.msra.mxu0 0.0
    %517 = vmatprep.subr.mxu0 0.0
    %518 = vmatpush2.msra.mxu0 0.0
    %519 = vmatprep.subr.mxu0 0.0
    %520 = vmatpush2.msra.mxu0 0.0
    %521 = vmatprep.subr.mxu0 0.0
    %522 = vmatpush2.msra.mxu0 0.0
    %523 = vmatprep.subr.mxu0 0.0
    %524 = vmatpush2.msra.mxu0 0.0
    %525 = vmatprep.subr.mxu0 0.0
    %526 = vmatpush2.msra.mxu0 0.0
    %527 = vmatprep.subr.mxu0 0.0
    %528 = vmatpush2.msra.mxu0 0.0
    %529 = vmatprep.subr.mxu0 0.0
    %530 = vmatpush2.msra.mxu0 0.0
    %531 = vmatprep.subr.mxu0 0.0
    %532 = vmatpush2.msra.mxu0 0.0
    %533 = vmatprep.subr.mxu0 0.0
    %534 = vmatpush2.msra.mxu0 0.0
    %535 = vmatprep.subr.mxu0 0.0
    %536 = vmatpush2.msra.mxu0 0.0
    %537 = vmatprep.mubr.f32.mxu0 0.0
    %538 = vmatmul.mubr.f32.gmra.mxu0 %v471
    %v539 = vpop.f32.mrf.mxu0
    %v540 = vadd.f32 0.0, %v539
    %v541 = vpop.f32.mrf.mxu0
    %542 = vdwg.mxu0
    %v544 = vrot.slane %v540, 4
    %v545 = vrot.slane %v540, 5
    %v548 = vadd.f32 %v119, %v544
    %v549 = vadd.f32 %v124, %v545
    %v550 = vtanh.pop %v548
    %v551 = vtanh.pop %v549
    %v554 = vrot.slane %v550, 4
    %v555 = vrot.slane %v551, 3
    %v556 = vsel %vm213, %v555, %v554
    %v557 = vsel %vm128, %v556, 0
    %559 = vmatprep.subr.mxu0 0.0
    %560 = vmatpush1.msra.mxu0 0.0
    %561 = vmatprep.subr.mxu0 0.0
    %562 = vmatpush1.msra.mxu0 0.0
    %563 = vmatprep.subr.mxu0 0.0
    %564 = vmatpush1.msra.mxu0 0.0
    %565 = vmatprep.subr.mxu0 0.0
    %566 = vmatpush1.msra.mxu0 0.0
    %567 = vmatprep.subr.mxu0 0.0
    %568 = vmatpush1.msra.mxu0 0.0
    %569 = vmatprep.subr.mxu0 0.0
    %570 = vmatpush1.msra.mxu0 0.0
    %571 = vmatprep.subr.mxu0 0.0
    %572 = vmatpush1.msra.mxu0 0.0
    %573 = vmatprep.subr.mxu0 0.0
    %574 = vmatpush1.msra.mxu0 0.0
    %575 = vmatprep.subr.mxu0 0.0
    %576 = vmatpush1.msra.mxu0 0.0
    %577 = vmatprep.subr.mxu0 0.0
    %578 = vmatpush1.msra.mxu0 0.0
    %579 = vmatprep.subr.mxu0 0.0
    %580 = vmatpush1.msra.mxu0 0.0
    %581 = vmatprep.subr.mxu0 0.0
    %582 = vmatpush1.msra.mxu0 0.0
    %583 = vmatprep.subr.mxu0 0.0
    %584 = vmatpush1.msra.mxu0 0.0
    %585 = vmatprep.subr.mxu0 0.0
    %586 = vmatpush1.msra.mxu0 0.0
    %587 = vmatprep.subr.mxu0 0.0
    %588 = vmatpush1.msra.mxu0 %v31
    %589 = vmatprep.subr.mxu0 0.0
    %590 = vmatpush1.msra.mxu0 %v30
    %591 = vmatprep.subr.mxu0 0.0
    %592 = vmatpush2.msra.mxu0 0.0
    %593 = vmatprep.subr.mxu0 0.0
    %594 = vmatpush2.msra.mxu0 0.0
    %595 = vmatprep.subr.mxu0 0.0
    %596 = vmatpush2.msra.mxu0 0.0
    %597 = vmatprep.subr.mxu0 0.0
    %598 = vmatpush2.msra.mxu0 0.0
    %599 = vmatprep.subr.mxu0 0.0
    %600 = vmatpush2.msra.mxu0 0.0
    %601 = vmatprep.subr.mxu0 0.0
    %602 = vmatpush2.msra.mxu0 0.0
    %603 = vmatprep.subr.mxu0 0.0
    %604 = vmatpush2.msra.mxu0 0.0
    %605 = vmatprep.subr.mxu0 0.0
    %606 = vmatpush2.msra.mxu0 0.0
    %607 = vmatprep.subr.mxu0 0.0
    %608 = vmatpush2.msra.mxu0 0.0
    %609 = vmatprep.subr.mxu0 0.0
    %610 = vmatpush2.msra.mxu0 0.0
    %611 = vmatprep.subr.mxu0 0.0
    %612 = vmatpush2.msra.mxu0 0.0
    %613 = vmatprep.subr.mxu0 0.0
    %614 = vmatpush2.msra.mxu0 0.0
    %615 = vmatprep.subr.mxu0 0.0
    %616 = vmatpush2.msra.mxu0 0.0
    %617 = vmatprep.subr.mxu0 0.0
    %618 = vmatpush2.msra.mxu0 0.0
    %619 = vmatprep.subr.mxu0 0.0
    %620 = vmatpush2.msra.mxu0 0.0
    %621 = vmatprep.subr.mxu0 0.0
    %622 = vmatpush2.msra.mxu0 0.0
    %623 = vmatprep.mubr.f32.mxu0 0.0
    %624 = vmatmul.mubr.f32.gmra.mxu0 %v557
    %v625 = vpop.f32.mrf.mxu0
    %v626 = vadd.f32 0.0, %v625
    %v627 = vpop.f32.mrf.mxu0
    %628 = vdwg.mxu0
    %v630 = vrot.slane %v626, 3
    %v631 = vrot.slane %v626, 4
    %v634 = vadd.f32 %v119, %v630
    %v635 = vadd.f32 %v124, %v631
    %v636 = vtanh.pop %v634
    %v637 = vtanh.pop %v635
    %v640 = vrot.slane %v636, 5
    %v641 = vrot.slane %v637, 4
    %v642 = vsel %vm213, %v641, %v640
    %v643 = vsel %vm128, %v642, 0
    %645 = vmatprep.subr.mxu0 0.0
    %646 = vmatpush1.msra.mxu0 0.0
    %647 = vmatprep.subr.mxu0 0.0
    %648 = vmatpush1.msra.mxu0 0.0
    %649 = vmatprep.subr.mxu0 0.0
    %650 = vmatpush1.msra.mxu0 0.0
    %651 = vmatprep.subr.mxu0 0.0
    %652 = vmatpush1.msra.mxu0 0.0
    %653 = vmatprep.subr.mxu0 0.0
    %654 = vmatpush1.msra.mxu0 0.0
    %655 = vmatprep.subr.mxu0 0.0
    %656 = vmatpush1.msra.mxu0 0.0
    %657 = vmatprep.subr.mxu0 0.0
    %658 = vmatpush1.msra.mxu0 0.0
    %659 = vmatprep.subr.mxu0 0.0
    %660 = vmatpush1.msra.mxu0 0.0
    %661 = vmatprep.subr.mxu0 0.0
    %662 = vmatpush1.msra.mxu0 0.0
    %663 = vmatprep.subr.mxu0 0.0
    %664 = vmatpush1.msra.mxu0 0.0
    %665 = vmatprep.subr.mxu0 0.0
    %666 = vmatpush1.msra.mxu0 0.0
    %667 = vmatprep.subr.mxu0 0.0
    %668 = vmatpush1.msra.mxu0 0.0
    %669 = vmatprep.subr.mxu0 0.0
    %670 = vmatpush1.msra.mxu0 0.0
    %671 = vmatprep.subr.mxu0 0.0
    %672 = vmatpush1.msra.mxu0 0.0
    %673 = vmatprep.subr.mxu0 0.0
    %674 = vmatpush1.msra.mxu0 %v31
    %675 = vmatprep.subr.mxu0 0.0
    %676 = vmatpush1.msra.mxu0 %v30
    %677 = vmatprep.subr.mxu0 0.0
    %678 = vmatpush2.msra.mxu0 0.0
    %679 = vmatprep.subr.mxu0 0.0
    %680 = vmatpush2.msra.mxu0 0.0
    %681 = vmatprep.subr.mxu0 0.0
    %682 = vmatpush2.msra.mxu0 0.0
    %683 = vmatprep.subr.mxu0 0.0
    %684 = vmatpush2.msra.mxu0 0.0
    %685 = vmatprep.subr.mxu0 0.0
    %686 = vmatpush2.msra.mxu0 0.0
    %687 = vmatprep.subr.mxu0 0.0
    %688 = vmatpush2.msra.mxu0 0.0
    %689 = vmatprep.subr.mxu0 0.0
    %690 = vmatpush2.msra.mxu0 0.0
    %691 = vmatprep.subr.mxu0 0.0
    %692 = vmatpush2.msra.mxu0 0.0
    %693 = vmatprep.subr.mxu0 0.0
    %694 = vmatpush2.msra.mxu0 0.0
    %695 = vmatprep.subr.mxu0 0.0
    %696 = vmatpush2.msra.mxu0 0.0
    %697 = vmatprep.subr.mxu0 0.0
    %698 = vmatpush2.msra.mxu0 0.0
    %699 = vmatprep.subr.mxu0 0.0
    %700 = vmatpush2.msra.mxu0 0.0
    %701 = vmatprep.subr.mxu0 0.0
    %702 = vmatpush2.msra.mxu0 0.0
    %703 = vmatprep.subr.mxu0 0.0
    %704 = vmatpush2.msra.mxu0 0.0
    %705 = vmatprep.subr.mxu0 0.0
    %706 = vmatpush2.msra.mxu0 0.0
    %707 = vmatprep.subr.mxu0 0.0
    %708 = vmatpush2.msra.mxu0 0.0
    %709 = vmatprep.mubr.f32.mxu0 0.0
    %710 = vmatmul.mubr.f32.gmra.mxu0 %v643
    %v711 = vpop.f32.mrf.mxu0
    %v712 = vadd.f32 0.0, %v711
    %v713 = vpop.f32.mrf.mxu0
    %714 = vdwg.mxu0
    %v716 = vrot.slane %v712, 2
    %v717 = vrot.slane %v712, 3
    %v720 = vadd.f32 %v119, %v716
    %v721 = vadd.f32 %v124, %v717
    %v722 = vtanh.pop %v720
    %v723 = vtanh.pop %v721
    %v726 = vrot.slane %v722, 6
    %v727 = vrot.slane %v723, 5
    %v728 = vsel %vm213, %v727, %v726
    %v729 = vsel %vm128, %v728, 0
    %731 = vmatprep.subr.mxu0 0.0
    %732 = vmatpush1.msra.mxu0 0.0
    %733 = vmatprep.subr.mxu0 0.0
    %734 = vmatpush1.msra.mxu0 0.0
    %735 = vmatprep.subr.mxu0 0.0
    %736 = vmatpush1.msra.mxu0 0.0
    %737 = vmatprep.subr.mxu0 0.0
    %738 = vmatpush1.msra.mxu0 0.0
    %739 = vmatprep.subr.mxu0 0.0
    %740 = vmatpush1.msra.mxu0 0.0
    %741 = vmatprep.subr.mxu0 0.0
    %742 = vmatpush1.msra.mxu0 0.0
    %743 = vmatprep.subr.mxu0 0.0
    %744 = vmatpush1.msra.mxu0 0.0
    %745 = vmatprep.subr.mxu0 0.0
    %746 = vmatpush1.msra.mxu0 0.0
    %747 = vmatprep.subr.mxu0 0.0
    %748 = vmatpush1.msra.mxu0 0.0
    %749 = vmatprep.subr.mxu0 0.0
    %750 = vmatpush1.msra.mxu0 0.0
    %751 = vmatprep.subr.mxu0 0.0
    %752 = vmatpush1.msra.mxu0 0.0
    %753 = vmatprep.subr.mxu0 0.0
    %754 = vmatpush1.msra.mxu0 0.0
    %755 = vmatprep.subr.mxu0 0.0
    %756 = vmatpush1.msra.mxu0 0.0
    %757 = vmatprep.subr.mxu0 0.0
    %758 = vmatpush1.msra.mxu0 0.0
    %759 = vmatprep.subr.mxu0 0.0
    %760 = vmatpush1.msra.mxu0 %v31
    %761 = vmatprep.subr.mxu0 0.0
    %762 = vmatpush1.msra.mxu0 %v30
    %763 = vmatprep.subr.mxu0 0.0
    %764 = vmatpush2.msra.mxu0 0.0
    %765 = vmatprep.subr.mxu0 0.0
    %766 = vmatpush2.msra.mxu0 0.0
    %767 = vmatprep.subr.mxu0 0.0
    %768 = vmatpush2.msra.mxu0 0.0
    %769 = vmatprep.subr.mxu0 0.0
    %770 = vmatpush2.msra.mxu0 0.0
    %771 = vmatprep.subr.mxu0 0.0
    %772 = vmatpush2.msra.mxu0 0.0
    %773 = vmatprep.subr.mxu0 0.0
    %774 = vmatpush2.msra.mxu0 0.0
    %775 = vmatprep.subr.mxu0 0.0
    %776 = vmatpush2.msra.mxu0 0.0
    %777 = vmatprep.subr.mxu0 0.0
    %778 = vmatpush2.msra.mxu0 0.0
    %779 = vmatprep.subr.mxu0 0.0
    %780 = vmatpush2.msra.mxu0 0.0
    %781 = vmatprep.subr.mxu0 0.0
    %782 = vmatpush2.msra.mxu0 0.0
    %783 = vmatprep.subr.mxu0 0.0
    %784 = vmatpush2.msra.mxu0 0.0
    %785 = vmatprep.subr.mxu0 0.0
    %786 = vmatpush2.msra.mxu0 0.0
    %787 = vmatprep.subr.mxu0 0.0
    %788 = vmatpush2.msra.mxu0 0.0
    %789 = vmatprep.subr.mxu0 0.0
    %790 = vmatpush2.msra.mxu0 0.0
    %791 = vmatprep.subr.mxu0 0.0
    %792 = vmatpush2.msra.mxu0 0.0
    %793 = vmatprep.subr.mxu0 0.0
    %794 = vmatpush2.msra.mxu0 0.0
    %795 = vmatprep.mubr.f32.mxu0 0.0
    %796 = vmatmul.mubr.f32.gmra.mxu0 %v729
    %v797 = vpop.f32.mrf.mxu0
    %v798 = vadd.f32 0.0, %v797
    %v799 = vpop.f32.mrf.mxu0
    %800 = vdwg.mxu0
    %v802 = vrot.slane %v798, 1
    %v803 = vrot.slane %v798, 2
    %v806 = vadd.f32 %v119, %v802
    %v807 = vadd.f32 %v124, %v803
    %v808 = vtanh.pop %v806
    %v809 = vtanh.pop %v807
    %v812 = vrot.slane %v809, 7
    %vm815 = vcmask 130055
    %816 = vst.msk [vmem:[#allocation2 - $0x7] sm:$0x80] %vm815, %v808
    %vm817 = vcmask 122880
    %818 = vst.msk [vmem:[#allocation2 + $0x1] sm:$0x1] %vm817, %v812
    %vm819 = vcmask 1040384
    %v820 = vsel %vm819, %v208, %v293
    %v821 = vsel %vm48, %v820, %v378
    %vm822 = vcmask 1042432
    %v823 = vsel %vm822, %v821, %v464
    %vm824 = vcmask 1043456
    %v825 = vsel %vm824, %v823, %v550
    %vm826 = vcmask 1044480
    %v827 = vsel %vm826, %v825, %v636
    %vm828 = vcmask 1045504
    %v829 = vsel %vm828, %v827, %v722
    %vm830 = vcmask 1046528
    %v831 = vsel %vm830, %v829, %v808
    %v832 = vsel %vm819, %v209, %v294
    %v833 = vsel %vm48, %v832, %v379
    %v834 = vsel %vm822, %v833, %v465
    %v835 = vsel %vm824, %v834, %v551
    %v836 = vsel %vm826, %v835, %v637
    %v837 = vsel %vm828, %v836, %v723
    %v838 = vsel %vm830, %v837, %v809
    %v839 = vld [vmem:[%s5] sm:$0xff]
    %v840 = vld [vmem:[%s5 + $0x8] sm:$0xff]
    %v841 = vld [vmem:[%s6] sm:$0x1]
    %v843 = vlaneseq
    %v844 = vshrl.u32 %v843, 7
    %v845 = vsub.s32 0, %v844
    %v846 = vrot.slane %v841, %v845
    %v849 = vsel %vm128, %v831, 0
    %v852 = vsel %vm128, %v838, 0
    %854 = vmatprep.subr.mxu0 0.0
    %855 = vmatpush1.msra.mxu0 0.0
    %856 = vmatprep.subr.mxu0 0.0
    %857 = vmatpush1.msra.mxu0 0.0
    %858 = vmatprep.subr.mxu0 0.0
    %859 = vmatpush1.msra.mxu0 0.0
    %860 = vmatprep.subr.mxu0 0.0
    %861 = vmatpush1.msra.mxu0 0.0
    %862 = vmatprep.subr.mxu0 0.0
    %863 = vmatpush1.msra.mxu0 0.0
    %864 = vmatprep.subr.mxu0 0.0
    %865 = vmatpush1.msra.mxu0 0.0
    %866 = vmatprep.subr.mxu0 0.0
    %867 = vmatpush1.msra.mxu0 0.0
    %868 = vmatprep.subr.mxu0 0.0
    %869 = vmatpush1.msra.mxu0 0.0
    %870 = vmatprep.subr.mxu0 0.0
    %871 = vmatpush1.msra.mxu0 0.0
    %872 = vmatprep.subr.mxu0 0.0
    %873 = vmatpush1.msra.mxu0 0.0
    %874 = vmatprep.subr.mxu0 0.0
    %875 = vmatpush1.msra.mxu0 0.0
    %876 = vmatprep.subr.mxu0 0.0
    %877 = vmatpush1.msra.mxu0 0.0
    %878 = vmatprep.subr.mxu0 0.0
    %879 = vmatpush1.msra.mxu0 0.0
    %880 = vmatprep.subr.mxu0 0.0
    %881 = vmatpush1.msra.mxu0 0.0
    %882 = vmatprep.subr.mxu0 0.0
    %883 = vmatpush1.msra.mxu0 %v840
    %884 = vmatprep.subr.mxu0 0.0
    %885 = vmatpush1.msra.mxu0 %v839
    %886 = vmatprep.subr.mxu0 0.0
    %887 = vmatpush2.msra.mxu0 0.0
    %888 = vmatprep.subr.mxu0 0.0
    %889 = vmatpush2.msra.mxu0 0.0
    %890 = vmatprep.subr.mxu0 0.0
    %891 = vmatpush2.msra.mxu0 0.0
    %892 = vmatprep.subr.mxu0 0.0
    %893 = vmatpush2.msra.mxu0 0.0
    %894 = vmatprep.subr.mxu0 0.0
    %895 = vmatpush2.msra.mxu0 0.0
    %896 = vmatprep.subr.mxu0 0.0
    %897 = vmatpush2.msra.mxu0 0.0
    %898 = vmatprep.subr.mxu0 0.0
    %899 = vmatpush2.msra.mxu0 0.0
    %900 = vmatprep.subr.mxu0 0.0
    %901 = vmatpush2.msra.mxu0 0.0
    %902 = vmatprep.subr.mxu0 0.0
    %903 = vmatpush2.msra.mxu0 0.0
    %904 = vmatprep.subr.mxu0 0.0
    %905 = vmatpush2.msra.mxu0 0.0
    %906 = vmatprep.subr.mxu0 0.0
    %907 = vmatpush2.msra.mxu0 0.0
    %908 = vmatprep.subr.mxu0 0.0
    %909 = vmatpush2.msra.mxu0 0.0
    %910 = vmatprep.subr.mxu0 0.0
    %911 = vmatpush2.msra.mxu0 0.0
    %912 = vmatprep.subr.mxu0 0.0
    %913 = vmatpush2.msra.mxu0 0.0
    %914 = vmatprep.subr.mxu0 0.0
    %915 = vmatpush2.msra.mxu0 0.0
    %916 = vmatprep.subr.mxu0 0.0
    %917 = vmatpush2.msra.mxu0 0.0
    %918 = vmatprep.mubr.f32.mxu0 0.0
    %919 = vmatmul.mubr.f32.gmra.mxu0 %v849
    %v920 = vpop.f32.mrf.mxu0
    %v921 = vadd.f32 %v846, %v920
    %v922 = vpop.f32.mrf.mxu0
    %923 = vmatprep.mubr.f32.mxu0 0.0
    %924 = vmatmul.mubr.f32.gmra.mxu0 %v852
    %v925 = vpop.f32.mrf.mxu0
    %v926 = vadd.f32 %v846, %v925
    %v927 = vpop.f32.mrf.mxu0
    %928 = vdwg.mxu0
    %931 = vrot.lane.b32.xlu0 %v921, 1
    %v932 = vpop.permute.xlu0 %931
    %933 = vrot.lane.b32.xlu0 %v926, 1
    %v934 = vpop.permute.xlu0 %933
    %v937 = vsub.f32 %v921, %v932
    %v938 = vsub.f32 %v926, %v934
    %v939 = vsub.f32 0.0, %v937
    %v940 = vsub.f32 0.0, %v938
    %v941 = vmul.f32 %v939, 1.442695
    %v942 = vpow.pop %v941
    %v943 = vmul.f32 %v940, 1.442695
    %v944 = vpow.pop %v943
    %v945 = vadd.f32 %v942, 1.0
    %v946 = vadd.f32 %v944, 1.0
    %v947 = vrcp.pop %v945
    %v948 = vmul.f32 1.0, %v947
    %v949 = vrcp.pop %v946
    %v950 = vmul.f32 1.0, %v949
    %v951 = vmul.f32 %v937, 1.442695
    %v952 = vpow.pop %v951
    %v953 = vmul.f32 %v938, 1.442695
    %v954 = vpow.pop %v953
    %v955 = vadd.f32 %v952, 1.0
    %v956 = vadd.f32 %v954, 1.0
    %v957 = vrcp.pop %v955
    %v958 = vmul.f32 1.0, %v957
    %v959 = vrcp.pop %v956
    %v960 = vmul.f32 1.0, %v959
    %963 = vrot.lane.b32.xlu0 %v958, 127
    %v964 = vpop.permute.xlu0 %963
    %965 = vrot.lane.b32.xlu0 %v960, 127
    %v966 = vpop.permute.xlu0 %965
    %vm969 = vcmask 7168
    %v970 = vsel %vm969, %v964, %v948
    %v971 = vsel %vm969, %v966, %v950
    %972 = vst.msk [vmem:[%s7] sm:$0xff] %vm41, %v970
    %973 = vst.msk [vmem:[%s7 + $0x8] sm:$0xff] %vm41, %v971
    // Predicated region
    $region30: #{rnn_agent_forward.1} parent=1 // pred_check
      _
    $region31: #{rnn_agent_forward.1} parent=1 // pred_check_branch
      %975 = sbr.rel (0) target = $region33
    $region32: #{rnn_agent_forward.1} parent=1 // pred_region
      _
    $region33: #{rnn_agent_forward.1} parent=1 // pred_fallthru
      _
    // Predicated region
    $region34: #{rnn_agent_forward.1} parent=1 // pred_check
      _
    $region35: #{rnn_agent_forward.1} parent=1 // pred_check_branch
      %977 = sbr.rel (0) target = $region37
    $region36: #{rnn_agent_forward.1} parent=1 // pred_region
      %s979 = ssub.s32 32, 32
      %980 = vsyncadd [#allocation3], %s979
      %s982 = sshll.u32 [#allocation2], 4
      %s983 = int_to_ptr.vmem [resolvable:$true] %s982
      %985 = dma.vmem_to_hbm [thread:$0]  %s983, 32, %s8, [#allocation3]
    $region37: #{rnn_agent_forward.1} parent=1 // pred_fallthru
      _
    // Predicated region
    $region38: #{rnn_agent_forward.1} parent=1 // pred_check
      _
    $region39: #{rnn_agent_forward.1} parent=1 // pred_check_branch
      %987 = sbr.rel (0) target = $region41
    $region40: #{rnn_agent_forward.1} parent=1 // pred_region
      _
    $region41: #{rnn_agent_forward.1} parent=1 // pred_fallthru
      _
    // Predicated region
    $region42: #{rnn_agent_forward.1} parent=1 // pred_check
      _
    $region43: #{rnn_agent_forward.1} parent=1 // pred_check_branch
      %989 = sbr.rel (0) target = $region45
    $region44: #{rnn_agent_forward.1} parent=1 // pred_region
      %990 = dma.done [#allocation3], 32
    $region45: #{rnn_agent_forward.1} parent=1 // pred_fallthru
      _
    %991 = vsyncpa [#allocation3], 1

</llo_original>
